<compile_context>
chip_gen: v6e
topology: v6e:2x2x1
jax: 0.10.0
libtpu: 0.0.40
codegen_flags: <defaults>
</compile_context>

<pallas_src>
import jax
import jax.numpy as jnp
from jax import lax
from jax.experimental import pallas as pl
from jax.experimental.pallas import tpu as pltpu


def _round_up(x: int, m: int) -> int:
    return ((x + m - 1) // m) * m


def _vmem_capacity_bytes() -> int:
    try:
        return int(pltpu.get_tpu_info().vmem_capacity_bytes)
    except Exception:
        return 64 * 1024 * 1024  # v7x-safe default (64 MiB / TC)


def _device_kind() -> str:
    try:
        return jax.devices()[0].device_kind.lower()
    except Exception:
        return ""


# ---------------------------------------------------------------------------
# Fast path: VMEM-resident table, vocab-chunked one-hot MXU gather.
# ---------------------------------------------------------------------------
def _make_onehot_gather_kernel(v_chunk: int):
    def kernel(ids_ref, emb_ref, out_ref):
        ids = ids_ref[...]                       # (TB, 1) int32, lane-broadcast
        tb = ids.shape[0]
        v_pad, e = emb_ref.shape
        n_chunks = v_pad // v_chunk

        def chunk_dot(base):
            col = lax.broadcasted_iota(jnp.int32, (tb, v_chunk), 1) + base
            onehot = (col == ids).astype(emb_ref.dtype)
            return jnp.dot(onehot, emb_ref[pl.ds(base, v_chunk), :],
                           preferred_element_type=jnp.float32)

        if n_chunks == 1:
            acc = chunk_dot(0)
        else:
            def body(c, acc):
                base = pl.multiple_of(c * v_chunk, v_chunk)
                return acc + chunk_dot(base)
            acc = lax.fori_loop(0, n_chunks, body,
                                jnp.zeros((tb, e), jnp.float32))
        out_ref[...] = acc.astype(out_ref.dtype)

    return kernel


# ---------------------------------------------------------------------------
# Fallback: HBM table, R data-dependent row DMAs in flight per grid step.
# ---------------------------------------------------------------------------
def _make_dma_gather_kernel(rows: int):
    def kernel(ids_ref, emb_ref, out_ref, row_buf, sems):
        # ids_ref : (N_pad,) int32 in SMEM (scalar prefetch)
        # emb_ref : (V, E) in HBM / ANY
        # out_ref : (rows, E) VMEM output tile
        # row_buf : (rows, E) VMEM scratch
        # sems    : DMA semaphores, shape (rows,)
        base = pl.program_id(0) * rows
        copies = []
        for r in range(rows):                    # static unroll: all DMAs in flight
            row = ids_ref[base + r]
            cp = pltpu.make_async_copy(
                emb_ref.at[pl.ds(row, 1), :],
                row_buf.at[pl.ds(r, 1), :],
                sems.at[r],
            )
            cp.start()
            copies.append(cp)
        for cp in copies:
            cp.wait()
        out_ref[...] = row_buf[...]              # one aligned (rows, E) store

    return kernel


# ---------------------------------------------------------------------------
# Wrapper (== nn.Embedding(V, E)(sent) forward)
# ---------------------------------------------------------------------------
def embedding_lookup(
    emb: jax.Array,
    sent: jax.Array,
    *,
    token_block: int = 256,
    rows_per_step: int = 16,
    gather_slab_tokens: int = 65536,
    force_gather_fallback: bool = False,
) -> jax.Array:
    V, E = emb.shape
    id_shape = sent.shape
    itemsize = jnp.dtype(emb.dtype).itemsize

    # Clamp ids (PyTorch would raise on OOB; clamping keeps both paths safe
    # and mutually consistent, and prevents OOB HBM DMAs in the fallback).
    flat_ids = jnp.clip(sent.reshape(-1).astype(jnp.int32), 0, V - 1)
    N = int(flat_ids.shape[0])

    # Chip-aware budgets.
    vmem_cap = _vmem_capacity_bytes()
    vmem_limit = int(vmem_cap * 0.84)            # ~107 MiB on v5e/v6e, ~54 MiB on v7x
    kind = _device_kind()
    is_v5e = ("v5e" in kind) or ("v5 lite" in kind) or ("v5lite" in kind)
    onehot_max_vocab = 8192 if is_v5e else 32768  # v5e MXU (197 TF/s) caps lower

    # Vocab chunking for the in-kernel one-hot matmul (keeps MXU K >= 256/512
    # while never materializing a (TB, V) one-hot).
    if V >= 512:
        v_chunk = 512
        V_pad = _round_up(V, v_chunk)
    else:
        V_pad = _round_up(V, 8)
        v_chunk = V_pad

    # Token block: shrink for very wide embeddings so per-step output/acc
    # buffers stay a small fraction of VMEM (matters on v7x's 64 MiB/TC).
    TB = max(64, (token_block // 8) * 8)
    while TB > 64 and (3 * TB * E * itemsize + TB * E * 4) > vmem_limit // 4:
        TB //= 2
    if N <= TB:
        TB = max(8, _round_up(N, 8))             # single block == full extent

    # Residency accounting (table is fetched from HBM once, but the auto
    # pipeline still allocates 2 buffers for it; intermediates included).
    # TODO(synk): single-buffer the resident table (pl.Buffered(1)) to halve
    # its VMEM footprint once that knob is relied upon.
    resident_bytes = (
        2 * V_pad * E * itemsize                 # table (double-buffered alloc)
        + 2 * TB * E * itemsize                  # output tiles (double-buffered)
        + 2 * _round_up(TB, 8) * 128 * 4         # (TB,1) id tiles pad to (8,128) i32
        + TB * E * 4                             # f32 accumulator
        + 3 * TB * v_chunk * 4                   # iota / compare / one-hot chunk
        + 2 * 1024 * 1024                        # slack
    )
    use_resident = (
        (not force_gather_fallback)
        and V <= onehot_max_vocab
        and resident_bytes <= vmem_limit
    )

    if use_resident:
        N_pad = _round_up(N, TB)
        ids_p = jnp.pad(flat_ids, (0, N_pad - N)).reshape(N_pad, 1)
        emb_p = jnp.pad(emb, ((0, V_pad - V), (0, 0))) if V_pad != V else emb

        out_flat = pl.pallas_call(
            _make_onehot_gather_kernel(v_chunk),
            out_shape=jax.ShapeDtypeStruct((N_pad, E), emb.dtype),
            grid_spec=pltpu.PrefetchScalarGridSpec(
                num_scalar_prefetch=0,
                grid=(N_pad // TB,),
                in_specs=[
                    pl.BlockSpec((TB, 1), lambda i: (i, 0)),    # token-id block
                    pl.BlockSpec((V_pad, E), lambda i: (0, 0)), # resident table
                ],
                out_specs=pl.BlockSpec((TB, E), lambda i: (i, 0)),
            ),
            compiler_params=pltpu.CompilerParams(
                dimension_semantics=("parallel",),               # megacore on v7x
                vmem_limit_bytes=vmem_limit,
            ),
        )(ids_p, emb_p)
        out_flat = out_flat[:N]
    else:
        R = max(8, (rows_per_step // 8) * 8)
        slab = max(R, (gather_slab_tokens // R) * R)             # bound SMEM prefetch
        kernel = _make_dma_gather_kernel(R)
        pieces = []
        for start in range(0, N, slab):
            ids_s = flat_ids[start:start + slab]
            n_s = int(ids_s.shape[0])
            n_pad = _round_up(n_s, R)
            ids_s = jnp.pad(ids_s, (0, n_pad - n_s))
            out_s = pl.pallas_call(
                kernel,
                out_shape=jax.ShapeDtypeStruct((n_pad, E), emb.dtype),
                grid_spec=pltpu.PrefetchScalarGridSpec(
                    num_scalar_prefetch=1,                       # ids -> SMEM
                    grid=(n_pad // R,),
                    in_specs=[pl.BlockSpec(memory_space=pl.ANY)],  # table in HBM
                    out_specs=pl.BlockSpec((R, E), lambda i, ids: (i, 0)),
                    scratch_shapes=[
                        pltpu.VMEM((R, E), emb.dtype),
                        pltpu.SemaphoreType.DMA((R,)),
                    ],
                ),
                compiler_params=pltpu.CompilerParams(
                    dimension_semantics=("parallel",),
                ),
            )(ids_s, emb)
            pieces.append(out_s[:n_s])
        out_flat = pieces[0] if len(pieces) == 1 else jnp.concatenate(pieces, 0)

    return out_flat.reshape(*id_shape, E)


if __name__ == "__main__":
    key = jax.random.PRNGKey(0)
    k_emb, k_ids, k_emb2, k_ids2 = jax.random.split(key, 4)

    # --- small case (matches the module's typical usage) -------------------
    V, E, B, S = 32, 128, 2, 8
    emb = jax.random.normal(k_emb, (V, E), dtype=jnp.float32)
    sent = jax.random.randint(k_ids, (B, S), minval=0, maxval=V, dtype=jnp.int32)
    ref = jnp.take(emb, sent.reshape(-1), axis=0).reshape(B, S, E)

    out_fast = jax.block_until_ready(embedding_lookup(emb, sent))
    assert out_fast.shape == (B, S, E)
    assert jnp.allclose(out_fast, ref), "fast-path embedding gather mismatch"

    # Also exercise the HBM-gather fallback path on the same data.
    out_gather = jax.block_until_ready(
        embedding_lookup(emb, sent, force_gather_fallback=True))
    assert jnp.allclose(out_gather, ref), "fallback embedding gather mismatch"

    # --- medium case: multi-block grid + vocab-chunked one-hot -------------
    V2, E2, B2, S2 = 640, 128, 2, 200
    emb2 = jax.random.normal(k_emb2, (V2, E2), dtype=jnp.float32)
    sent2 = jax.random.randint(k_ids2, (B2, S2), minval=0, maxval=V2, dtype=jnp.int32)
    ref2 = jnp.take(emb2, sent2.reshape(-1), axis=0).reshape(B2, S2, E2)
    out2 = jax.block_until_ready(embedding_lookup(emb2, sent2))
    assert jnp.allclose(out2, ref2), "chunked fast-path embedding gather mismatch"

    print("KERNEL_OK")
</pallas_src>

<mosaic_0001>
module attributes {stable_mosaic.version = 11 : i64} {
  func.func @kernel(%arg0: i32, %arg1: memref<16x1xi32, #tpu.memory_space<vmem>>, %arg2: memref<32x128xf32, #tpu.memory_space<vmem>>, %arg3: memref<16x128xf32, #tpu.memory_space<vmem>>) attributes {dimension_semantics = [#tpu.dimension_semantics<parallel>], iteration_bounds = array<i64: 1>, scalar_prefetch = 0 : i64, scratch_operands = 0 : i64, tpu.core_type = #tpu.core_type<tc>, window_params = [{transform_indices = @transform_0, window_bounds = array<i64: 16, 1>}, {pipeline_mode = #tpu.pipeline_mode<synchronous>, transform_indices = @transform_1, window_bounds = array<i64: 32, 128>}, {transform_indices = @transform_2, window_bounds = array<i64: 16, 128>}]} {
    %c0 = arith.constant 0 : index
    %c0_0 = arith.constant 0 : index
    %0 = vector.load %arg1[%c0, %c0_0] : memref<16x1xi32, #tpu.memory_space<vmem>>, vector<16x1xi32>
    %1 = tpu.iota {dimensions = array<i32: 1>} : vector<16x32xi32>
    %c0_i32 = arith.constant 0 : i32
    %2 = vector.broadcast %c0_i32 : i32 to vector<16x32xi32>
    %3 = arith.addi %1, %2 : vector<16x32xi32>
    %4 = vector.broadcast %0 : vector<16x1xi32> to vector<16x32xi32>
    %5 = arith.cmpi eq, %3, %4 : vector<16x32xi32>
    %6 = arith.extui %5 : vector<16x32xi1> to vector<16x32xi32>
    %7 = arith.sitofp %6 : vector<16x32xi32> to vector<16x32xf32>
    %c0_1 = arith.constant 0 : index
    %c0_2 = arith.constant 0 : index
    %8 = vector.load %arg2[%c0_1, %c0_2] : memref<32x128xf32, #tpu.memory_space<vmem>>, vector<32x128xf32>
    %cst = arith.constant dense<0.000000e+00> : vector<16x128xf32>
    %9 = tpu.matmul %7, %8, %cst {dimension_numbers = #tpu.dot_dimension_numbers<[1], [0], [0], [1], [0, 0, 1, 1], [], []>} : vector<16x32xf32>, vector<32x128xf32>, vector<16x128xf32> -> vector<16x128xf32>
    %c0_3 = arith.constant 0 : index
    %c0_4 = arith.constant 0 : index
    %10 = vector.load %arg3[%c0_3, %c0_4] : memref<16x128xf32, #tpu.memory_space<vmem>>, vector<16x128xf32>
    tpu.vector_store %arg3[%c0_3, %c0_4], %9 {strides = array<i32>} : memref<16x128xf32, #tpu.memory_space<vmem>>, vector<16x128xf32>,
    return
  }
  func.func @transform_0(%arg0: i32) -> (i32, i32) {
    %c0_i32 = arith.constant 0 : i32
    %c0_i32_0 = arith.constant 0 : i32
    return %arg0, %c0_i32 : i32, i32
  }
  func.func @transform_1(%arg0: i32) -> (i32, i32) {
    %c0_i32 = arith.constant 0 : i32
    %c0_i32_0 = arith.constant 0 : i32
    %c0_i32_1 = arith.constant 0 : i32
    return %c0_i32, %c0_i32_0 : i32, i32
  }
  func.func @transform_2(%arg0: i32) -> (i32, i32) {
    %c0_i32 = arith.constant 0 : i32
    %c0_i32_0 = arith.constant 0 : i32
    return %arg0, %c0_i32 : i32, i32
  }
}

</mosaic_0001>

<llo_original>
// kernel: tpu_custom_call.1
$region0: #{tpu_custom_call.1}
  #allocation0 [shape = 'u32[]', space=smem, size = 0x4, offset = 0x4, fixed_abs, tag = 'smem constant byte address 0x4 - core index']
  #allocation1 [shape = 'u32[144,128]{1,0:T(1,128)}', space=vmem, size = 0x12000, scoped, tag = 'internal scratch']
  %s0 = inlined_call_operand.vmem [shape: s32[16,1], index: 0, kind: input, shape index: {}]
  %s1 = inlined_call_operand.hbm [shape: f32[32,128], index: 1, kind: input, shape index: {}]
  %s2 = inlined_call_operand.hbm [shape: f32[16,128], index: 2, kind: output, shape index: {}]
  %s3 = sld [smem:[#allocation0]]
  $region22: #{tpu_custom_call.1} parent=0
    _
  %s5 = ssub.s32 1, %s3
  %s6 = scalar_select 0, %s5, %s3
  $region1: #{tpu_custom_call.1} parent=0
    #allocation2 [shape = 'u8[16384]{0}', space=vmem, size = 0x4000, scoped, tag = 'input window, operand 1, single buffered']
    #allocation3 [shape = 's32[1]{0}', space=sflag, size = 0x4, scoped, tag = 'scoped memory for tpu_custom_call.1']
    #allocation4 [shape = 's32[1]{0}', space=sflag, size = 0x4, scoped, tag = 'scoped memory for tpu_custom_call.1']
    #allocation5 [shape = 'u8[8192]{0}', space=vmem, size = 0x2000, scoped, tag = 'output window, operand 0, single buffered']
    %7 = vsyncpa [#allocation3], 0
    %8 = vsyncpa [#allocation4], 0
    // Predicated region
    $region2: #{tpu_custom_call.1} parent=1 // pred_check
      _
    $region3: #{tpu_custom_call.1} parent=1 // pred_check_branch
      %10 = sbr.rel (0) target = $region5
    $region4: #{tpu_custom_call.1} parent=1 // pred_region
      _
    $region5: #{tpu_custom_call.1} parent=1 // pred_fallthru
      _
    // Predicated region
    $region6: #{tpu_custom_call.1} parent=1 // pred_check
      _
    $region7: #{tpu_custom_call.1} parent=1 // pred_check_branch
      %12 = sbr.rel (0) target = $region9
    $region8: #{tpu_custom_call.1} parent=1 // pred_region
      %s14 = ssub.s32 512, 512
      %15 = vsyncadd [#allocation3], %s14
      %s16 = sshll.u32 [#allocation2], 4
      %s17 = int_to_ptr.vmem [resolvable:$true] %s16
      %22 = dma.hbm_to_vmem [thread:$0]  %s1, 512, %s17, [#allocation3], 128, 128, 8
    $region9: #{tpu_custom_call.1} parent=1 // pred_fallthru
      _
    // Predicated region
    $region10: #{tpu_custom_call.1} parent=1 // pred_check
      _
    $region11: #{tpu_custom_call.1} parent=1 // pred_check_branch
      %24 = sbr.rel (0) target = $region13
    $region12: #{tpu_custom_call.1} parent=1 // pred_region
      %25 = dma.done [#allocation3], 512
    $region13: #{tpu_custom_call.1} parent=1 // pred_fallthru
      _
    %v26 = vld [vmem:[%s0] sm:$0xff]
    %v27 = vld [vmem:[%s0 + $0x8] sm:$0xff]
    %v28 = vlaneseq
    %v29 = vand.u32 %v28, 127
    %30 = vset.pattern.permute.xlu0 0
    %31 = vperm.xlu0 %30, %v26
    %v32 = vpop.permute.xlu0 %31
    %33 = vset.pattern.permute.xlu0 0
    %34 = vperm.xlu0 %33, %v27
    %v35 = vpop.permute.xlu0 %34
    %vm36 = vcmp.eq.s32.totalorder %v29, %v32
    %vm37 = vcmp.eq.s32.totalorder %v29, %v35
    %v38 = vsel %vm36, 1, 0
    %v39 = vsel %vm37, 1, 0
    %v40 = vcvt.s32.f32 %v38
    %v41 = vcvt.s32.f32 %v39
    %v42 = vld [vmem:[#allocation2] sm:$0xff]
    %v43 = vld [vmem:[#allocation2 + $0x8] sm:$0xff]
    %v44 = vld [vmem:[#allocation2 + $0x10] sm:$0xff]
    %v45 = vld [vmem:[#allocation2 + $0x18] sm:$0xff]
    %vm46 = vcmask 261120
    %v48 = vsel %vm46, %v40, 0
    %v51 = vsel %vm46, %v41, 0
    %53 = vmatprep.subr.mxu0 0.0
    %54 = vmatpush1.msra.mxu0 0.0
    %55 = vmatprep.subr.mxu0 0.0
    %56 = vmatpush1.msra.mxu0 0.0
    %57 = vmatprep.subr.mxu0 0.0
    %58 = vmatpush1.msra.mxu0 0.0
    %59 = vmatprep.subr.mxu0 0.0
    %60 = vmatpush1.msra.mxu0 0.0
    %61 = vmatprep.subr.mxu0 0.0
    %62 = vmatpush1.msra.mxu0 0.0
    %63 = vmatprep.subr.mxu0 0.0
    %64 = vmatpush1.msra.mxu0 0.0
    %65 = vmatprep.subr.mxu0 0.0
    %66 = vmatpush1.msra.mxu0 0.0
    %67 = vmatprep.subr.mxu0 0.0
    %68 = vmatpush1.msra.mxu0 0.0
    %69 = vmatprep.subr.mxu0 0.0
    %70 = vmatpush1.msra.mxu0 0.0
    %71 = vmatprep.subr.mxu0 0.0
    %72 = vmatpush1.msra.mxu0 0.0
    %73 = vmatprep.subr.mxu0 0.0
    %74 = vmatpush1.msra.mxu0 0.0
    %75 = vmatprep.subr.mxu0 0.0
    %76 = vmatpush1.msra.mxu0 0.0
    %77 = vmatprep.subr.mxu0 0.0
    %78 = vmatpush1.msra.mxu0 %v45
    %79 = vmatprep.subr.mxu0 0.0
    %80 = vmatpush1.msra.mxu0 %v44
    %81 = vmatprep.subr.mxu0 0.0
    %82 = vmatpush1.msra.mxu0 %v43
    %83 = vmatprep.subr.mxu0 0.0
    %84 = vmatpush1.msra.mxu0 %v42
    %85 = vmatprep.subr.mxu0 0.0
    %86 = vmatpush2.msra.mxu0 0.0
    %87 = vmatprep.subr.mxu0 0.0
    %88 = vmatpush2.msra.mxu0 0.0
    %89 = vmatprep.subr.mxu0 0.0
    %90 = vmatpush2.msra.mxu0 0.0
    %91 = vmatprep.subr.mxu0 0.0
    %92 = vmatpush2.msra.mxu0 0.0
    %93 = vmatprep.subr.mxu0 0.0
    %94 = vmatpush2.msra.mxu0 0.0
    %95 = vmatprep.subr.mxu0 0.0
    %96 = vmatpush2.msra.mxu0 0.0
    %97 = vmatprep.subr.mxu0 0.0
    %98 = vmatpush2.msra.mxu0 0.0
    %99 = vmatprep.subr.mxu0 0.0
    %100 = vmatpush2.msra.mxu0 0.0
    %101 = vmatprep.subr.mxu0 0.0
    %102 = vmatpush2.msra.mxu0 0.0
    %103 = vmatprep.subr.mxu0 0.0
    %104 = vmatpush2.msra.mxu0 0.0
    %105 = vmatprep.subr.mxu0 0.0
    %106 = vmatpush2.msra.mxu0 0.0
    %107 = vmatprep.subr.mxu0 0.0
    %108 = vmatpush2.msra.mxu0 0.0
    %109 = vmatprep.subr.mxu0 0.0
    %110 = vmatpush2.msra.mxu0 0.0
    %111 = vmatprep.subr.mxu0 0.0
    %112 = vmatpush2.msra.mxu0 0.0
    %113 = vmatprep.subr.mxu0 0.0
    %114 = vmatpush2.msra.mxu0 0.0
    %115 = vmatprep.subr.mxu0 0.0
    %116 = vmatpush2.msra.mxu0 0.0
    %117 = vmatprep.mubr.f32.mxu0 0.0
    %118 = vmatmul.mubr.f32.gmra.mxu0 %v48
    %v119 = vpop.f32.mrf.mxu0
    %v120 = vadd.f32 0.0, %v119
    %v121 = vpop.f32.mrf.mxu0
    %122 = vmatprep.mubr.f32.mxu0 0.0
    %123 = vmatmul.mubr.f32.gmra.mxu0 %v51
    %v124 = vpop.f32.mrf.mxu0
    %v125 = vadd.f32 0.0, %v124
    %v126 = vpop.f32.mrf.mxu0
    %127 = vdwg.mxu0
    %128 = vst [vmem:[#allocation5] sm:$0xff] %v120
    %129 = vst [vmem:[#allocation5 + $0x8] sm:$0xff] %v125
    // Predicated region
    $region14: #{tpu_custom_call.1} parent=1 // pred_check
      _
    $region15: #{tpu_custom_call.1} parent=1 // pred_check_branch
      %131 = sbr.rel (0) target = $region17
    $region16: #{tpu_custom_call.1} parent=1 // pred_region
      %s133 = ssub.s32 256, 256
      %134 = vsyncadd [#allocation4], %s133
      %s135 = sshll.u32 [#allocation5], 4
      %s136 = int_to_ptr.vmem [resolvable:$true] %s135
      %141 = dma.vmem_to_hbm [thread:$0]  %s136, 256, %s2, [#allocation4], 128, 128, 8
    $region17: #{tpu_custom_call.1} parent=1 // pred_fallthru
      _
    // Predicated region
    $region18: #{tpu_custom_call.1} parent=1 // pred_check
      _
    $region19: #{tpu_custom_call.1} parent=1 // pred_check_branch
      %143 = sbr.rel (0) target = $region21
    $region20: #{tpu_custom_call.1} parent=1 // pred_region
      %144 = dma.done [#allocation4], 256
    $region21: #{tpu_custom_call.1} parent=1 // pred_fallthru
      _
    %145 = vsyncpa [#allocation3], 1
    %146 = vsyncpa [#allocation4], 1

</llo_original>
